<compile_context>
chip_gen: v7x
topology: tpu7x:2x2x1
jax: 0.10.0
libtpu: 0.0.40
codegen_flags: <defaults>
</compile_context>

<pallas_src>
import math
import jax
import jax.numpy as jnp
from jax.experimental import pallas as pl
from jax.experimental.pallas import tpu as pltpu


# ----------------------------------------------------------------------------- helpers
def _round_up(x, m):
    return ((x + m - 1) // m) * m


def _choose_tile(L, max_tl):
    """Pick the position-tile length.

    VMEM is a non-issue here (worst-case f32 tile at max_tl=4096, d_model=128 is 2 MiB,
    double-buffered 4 MiB, vs >=32 MiB scoped VMEM on every generation).  The levers that
    matter are (a) amortizing the ~0.35 us per-grid-step overhead with big tiles and
    (b) keeping >= 2 grid steps so the "parallel" grid axis feeds both v7x TensorCores.
    """
    target = min(max_tl, _round_up(pl.cdiv(L, 2), 8))
    if target >= L:
        return L          # single step; block == full array dim is always legal
    return target         # sublane-aligned (multiple of 8), guarantees >= 2 grid steps


def _pe_consts(d_model):
    """Merged grid-invariant constants, shape (2, d_model) f32.

    row 0: inv_freq[j] = exp(-(2*(j//2)) * ln(10000)/d_model)   (pairwise-duplicated div_term)
    row 1: phase[j]    = 0 on even lanes, pi/2 on odd lanes     (cos x = sin(x + pi/2))
    """
    j = jnp.arange(d_model)
    inv_freq = jnp.exp(((j // 2) * 2).astype(jnp.float32) * (-math.log(10000.0) / d_model))
    phase = jnp.where((j % 2) == 1, jnp.float32(math.pi / 2.0), jnp.float32(0.0))
    return jnp.stack([inv_freq, phase], axis=0).astype(jnp.float32)


def _pe_rows(consts_ref, tl, d_model, row_base):
    """Compute PE rows [row_base, row_base + tl) in f32, shape (tl, d_model)."""
    c = consts_ref[...]            # (2, d_model) f32, VMEM-resident across all grid steps
    inv_freq = c[0:1, :]           # (1, d_model)
    phase = c[1:2, :]              # (1, d_model)
    # NOTE(perf): the review suggested a float iota to drop this i32->f32 convert, but Mosaic's
    # iota lowering only reliably supports 32-bit *integer* element types, so we keep the int
    # ramp + one convert per vreg (the ~dozen-op sin polynomial dominates VALU work anyway).
    pos = (row_base + jax.lax.broadcasted_iota(jnp.int32, (tl, d_model), 0)).astype(jnp.float32)
    # One sin per element (cos x = sin(x + pi/2)) -> half the transcendental/VALU work.
    return jnp.sin(pos * inv_freq + phase)


# ----------------------------------------------------------------------------- kernels
def _pe_kernel(consts_ref, o_ref):
    tl, d_model = o_ref.shape
    pe = _pe_rows(consts_ref, tl, d_model, pl.program_id(0) * tl)
    o_ref[...] = pe.astype(o_ref.dtype)        # cast only at the store (f32 compute)


def _add_pe_kernel(consts_ref, x_ref, o_ref):
    _, tl, d_model = o_ref.shape
    pe = _pe_rows(consts_ref, tl, d_model, pl.program_id(0) * tl)       # (tl, d_model) f32
    # PE is computed once per tile and broadcast-added across the batch dim.
    o_ref[...] = (x_ref[...].astype(jnp.float32) + pe[None, :, :]).astype(o_ref.dtype)


# ----------------------------------------------------------------------------- wrappers
def positional_embedding(x, d_model, *, max_tl=4096, out_dtype=jnp.float32):
    """Forward of PositionalEmbedding: returns pe[:, :x.shape[1]], shape [1, L, d_model].

    Only x.shape[1] is used, exactly like the PyTorch forward.  d_model stays whole on the
    lane axis (unmasked lane-dense stores when d_model % 128 == 0); only positions are tiled.
    """
    L = x.shape[1]
    tL = _choose_tile(L, max_tl)
    consts = _pe_consts(d_model)

    pe2d = pl.pallas_call(
        _pe_kernel,
        out_shape=jax.ShapeDtypeStruct((L, d_model), out_dtype),
        grid_spec=pltpu.PrefetchScalarGridSpec(
            num_scalar_prefetch=0,
            grid=(pl.cdiv(L, tL),),
            in_specs=[
                pl.BlockSpec((2, d_model), lambda i: (0, 0)),   # merged resident constants
            ],
            out_specs=pl.BlockSpec((tL, d_model), lambda i: (i, 0)),
        ),
        compiler_params=pltpu.CompilerParams(dimension_semantics=("parallel",)),
    )(consts)

    return pe2d[None]  # [1, L, d_model] == self.pe[:, :L]


def add_positional_embedding(x, *, max_tl=4096, out_dtype=None):
    """Fused consumer pattern: returns x + pe[:, :L] in a single kernel (no HBM PE round-trip)."""
    B, L, d_model = x.shape
    out_dtype = x.dtype if out_dtype is None else out_dtype
    consts = _pe_consts(d_model)

    # Keep the (B, tL, d_model) x / out tiles around ~2 MiB each (still far below VMEM limits).
    cap = max(8, ((2 * 1024 * 1024) // (B * d_model * 4)) // 8 * 8)
    tL = _choose_tile(L, min(max_tl, cap))

    return pl.pallas_call(
        _add_pe_kernel,
        out_shape=jax.ShapeDtypeStruct((B, L, d_model), out_dtype),
        grid_spec=pltpu.PrefetchScalarGridSpec(
            num_scalar_prefetch=0,
            grid=(pl.cdiv(L, tL),),
            in_specs=[
                pl.BlockSpec((2, d_model), lambda i: (0, 0)),        # merged resident constants
                pl.BlockSpec((B, tL, d_model), lambda i: (0, i, 0)),  # x tile
            ],
            out_specs=pl.BlockSpec((B, tL, d_model), lambda i: (0, i, 0)),
        ),
        compiler_params=pltpu.CompilerParams(dimension_semantics=("parallel",)),
    )(consts, x)


# ----------------------------------------------------------------------------- reference
def reference(x, d_model, max_len=5000):
    """Pure-JAX port of the PyTorch buffer construction + slice, for verification."""
    L = x.shape[1]
    position = jnp.arange(max_len, dtype=jnp.float32)[:, None]
    div_term = jnp.exp(
        jnp.arange(0, d_model, 2, dtype=jnp.float32) * (-math.log(10000.0) / d_model)
    )
    pe = jnp.zeros((max_len, d_model), jnp.float32)
    pe = pe.at[:, 0::2].set(jnp.sin(position * div_term))
    pe = pe.at[:, 1::2].set(jnp.cos(position * div_term))
    return pe[None, :L]


if __name__ == "__main__":
    # Small shapes consistent with the module: x is [B, L, d_model]; only L matters for the
    # module forward.  d_model=128 keeps stores lane-dense; L=64 gives a 2-step grid so the
    # multi-tile (and v7x dual-TC) path is exercised.
    B, L, d_model = 2, 64, 128

    key = jax.random.PRNGKey(0)
    x = jax.random.normal(key, (B, L, d_model), dtype=jnp.float32)

    # Module-faithful forward: returns the PE table slice.
    pe = jax.block_until_ready(positional_embedding(x, d_model))
    ref = reference(x, d_model)
    assert pe.shape == (1, L, d_model)
    assert jnp.allclose(pe, ref, atol=1e-4, rtol=1e-4), "PE table mismatch vs JAX reference"

    # Fused consumer variant (top review item): x + pe in one kernel.
    fused = jax.block_until_ready(add_positional_embedding(x))
    assert fused.shape == (B, L, d_model)
    assert jnp.allclose(fused, x + ref, atol=1e-4, rtol=1e-4), "fused x+pe mismatch"

    print("KERNEL_OK")
</pallas_src>

<mosaic_0001>
module attributes {stable_mosaic.version = 11 : i64} {
  func.func @_pe_kernel(%arg0: i32, %arg1: memref<2x128xf32, #tpu.memory_space<vmem>>, %arg2: memref<32x128xf32, #tpu.memory_space<vmem>>) attributes {dimension_semantics = [#tpu.dimension_semantics<parallel>], iteration_bounds = array<i64: 2>, scalar_prefetch = 0 : i64, scratch_operands = 0 : i64, tpu.core_type = #tpu.core_type<tc>, window_params = [{pipeline_mode = #tpu.pipeline_mode<synchronous>, transform_indices = @transform_0, window_bounds = array<i64: 2, 128>}, {transform_indices = @transform_1, window_bounds = array<i64: 32, 128>}]} {
    %c32_i32 = arith.constant 32 : i32
    %0 = arith.muli %arg0, %c32_i32 : i32
    %c0 = arith.constant 0 : index
    %c0_0 = arith.constant 0 : index
    %1 = vector.load %arg1[%c0, %c0_0] : memref<2x128xf32, #tpu.memory_space<vmem>>, vector<2x128xf32>
    %2 = vector.extract_strided_slice %1 {offsets = [0, 0], sizes = [1, 128], strides = [1, 1]} : vector<2x128xf32> to vector<1x128xf32>
    %3 = vector.extract_strided_slice %1 {offsets = [1, 0], sizes = [1, 128], strides = [1, 1]} : vector<2x128xf32> to vector<1x128xf32>
    %4 = tpu.iota {dimensions = array<i32: 0>} : vector<32x128xi32>
    %5 = vector.broadcast %0 : i32 to vector<32x128xi32>
    %6 = arith.addi %5, %4 : vector<32x128xi32>
    %7 = arith.sitofp %6 : vector<32x128xi32> to vector<32x128xf32>
    %8 = vector.broadcast %2 : vector<1x128xf32> to vector<32x128xf32>
    %9 = arith.mulf %7, %8 : vector<32x128xf32>
    %10 = vector.broadcast %3 : vector<1x128xf32> to vector<32x128xf32>
    %11 = arith.addf %9, %10 : vector<32x128xf32>
    %12 = math.sin %11 : vector<32x128xf32>
    %c0_1 = arith.constant 0 : index
    %c0_2 = arith.constant 0 : index
    %13 = vector.load %arg2[%c0_1, %c0_2] : memref<32x128xf32, #tpu.memory_space<vmem>>, vector<32x128xf32>
    tpu.vector_store %arg2[%c0_1, %c0_2], %12 {strides = array<i32>} : memref<32x128xf32, #tpu.memory_space<vmem>>, vector<32x128xf32>,
    return
  }
  func.func @transform_0(%arg0: i32) -> (i32, i32) {
    %c0_i32 = arith.constant 0 : i32
    %c0_i32_0 = arith.constant 0 : i32
    %c0_i32_1 = arith.constant 0 : i32
    return %c0_i32, %c0_i32_0 : i32, i32
  }
  func.func @transform_1(%arg0: i32) -> (i32, i32) {
    %c0_i32 = arith.constant 0 : i32
    %c0_i32_0 = arith.constant 0 : i32
    return %arg0, %c0_i32 : i32, i32
  }
}

</mosaic_0001>

<llo_original>
// kernel: tpu_custom_call.1
$region0: #{tpu_custom_call.1}
  #allocation0 [shape = 'u32[]', space=smem, size = 0x4, offset = 0x4, fixed_abs, tag = 'smem constant byte address 0x4 - core index']
  #allocation1 [shape = 'u32[144,128]{1,0:T(1,128)}', space=vmem, size = 0x12000, scoped, tag = 'internal scratch']
  %s0 = inlined_call_operand.hbm [shape: f32[2,128], index: 0, kind: input, shape index: {}]
  %s1 = inlined_call_operand.hbm [shape: f32[64,128], index: 1, kind: output, shape index: {}]
  %s2 = sld [smem:[#allocation0]]
  $region41: #{tpu_custom_call.1} parent=0
    _
  %s4 = ssub.s32 1, %s2
  %s5 = scalar_select 0, %s4, %s2
  $region1: #{tpu_custom_call.1} parent=0
    #allocation2 [shape = 'u8[1024]{0}', space=vmem, size = 0x400, scoped, tag = 'input window, operand 0, single buffered']
    #allocation3 [shape = 's32[2]{0}', space=sflag, size = 0x8, scoped, tag = 'scoped memory for tpu_custom_call.1']
    #allocation4 [shape = 's32[2]{0}', space=sflag, size = 0x8, scoped, tag = 'scoped memory for tpu_custom_call.1']
    #allocation5 [shape = 'u8[32768]{0}', space=vmem, size = 0x8000, scoped, tag = 'output window, operand 0']
    %6 = vsyncpa [#allocation3], 0
    %7 = vsyncpa [#allocation4], 0
    %s8 = scalar_lea.sflag [#allocation4], 1
    %9 = vsyncpa %s8, 0
    loop: start=0, step=1, limit=4
    $region2: #{tpu_custom_call.1} parent=1 // loop_pre_header
      _
    $region3: #{tpu_custom_call.1} parent=1 // loop_header
      %s11 = sphi 0, %s15
      %p12 = scmp.ge.s32.totalorder %s11, 4
      %s19 = sphi 0, %s19
      %s21 = sphi 0, %s19
      %s22 = sphi 0, %s21
      %s36 = sphi 0, %s22
      %s42 = sphi 0, %s44
      %s45 = sphi 0, %s42
      %s46 = sphi 0, %s45
      %s62 = sphi 0, %s46
    $region4: #{tpu_custom_call.1} parent=1 // loop_header_branch
      %14 = sbr.rel (%p12) target = $region8
    $region5: #{tpu_custom_call.1} parent=1 // loop_body
      %s16 = ssub.s32 %s11, 1
      %s17 = ssub.s32 %s11, 2
      %s18 = sadd.s32 %s11, 1
      %s20 = sadd.s32 %s19, 1
      %p23 = scmp.eq.s32.totalorder %s11, 1
      %p24 = scmp.ne.s32.totalorder %s19, %s21
      %p25 = scmp.eq.s32.totalorder %s11, 0
      %p26 = por %p24, %p25
      %p27 = scmp.ne.s32.totalorder %s19, %s21
      %p28 = scmp.eq.s32.totalorder %s16, 1
      %p29 = por %p27, %p28
      %p30 = scmp.ne.s32.totalorder %s21, %s22
      %p31 = scmp.eq.s32.totalorder %s16, 0
      %p32 = por %p30, %p31
      %p33 = scmp.ne.s32.totalorder %s21, %s22
      %p34 = scmp.eq.s32.totalorder %s17, 1
      %p35 = por %p33, %p34
      %p37 = scmp.ne.s32.totalorder %s22, %s36
      %p38 = scmp.eq.s32.totalorder %s17, 0
      %p39 = por %p37, %p38
      %s40 = ssub.s32 %s11, %s18
      %p41 = scmp.eq.s32.totalorder %s40, 0
      %s43 = sadd.s32 %s42, 1
      %s44 = scalar_select %p41, %s42, %s43
      %p47 = pneg %p41
      %p48 = scmp.eq.s32.totalorder %s11, 1
      %p49 = por %p47, %p48
      %p50 = scmp.ne.s32.totalorder %s42, %s45
      %p51 = scmp.eq.s32.totalorder %s11, 0
      %p52 = por %p50, %p51
      %p53 = scmp.ne.s32.totalorder %s42, %s45
      %p54 = scmp.eq.s32.totalorder %s16, 1
      %p55 = por %p53, %p54
      %p56 = scmp.ne.s32.totalorder %s45, %s46
      %p57 = scmp.eq.s32.totalorder %s16, 0
      %p58 = por %p56, %p57
      %p59 = scmp.ne.s32.totalorder %s45, %s46
      %p60 = scmp.eq.s32.totalorder %s17, 1
      %p61 = por %p59, %p60
      %p63 = scmp.ne.s32.totalorder %s46, %s62
      %p64 = scmp.eq.s32.totalorder %s17, 0
      %p65 = por %p63, %p64
      %p66 = scmp.le.s32.totalorder 1, %s11
      %p67 = scmp.lt.s32.totalorder %s11, 3
      %p68 = pnand %p66, %p67
      %p69 = pneg %p68
      // Predicated region
      $region9: #{tpu_custom_call.1} parent=5 // pred_check
        _
      $region10: #{tpu_custom_call.1} parent=5 // pred_check_branch
        %71 = sbr.rel (%p68) target = $region12
      $region11: #{tpu_custom_call.1} parent=5 // pred_region
        %s72 = ssub.s32 %s11, 1
        // Predicated region
        $region13: #{tpu_custom_call.1} parent=11 // pred_check
          %p73 = pneg %p32
        $region14: #{tpu_custom_call.1} parent=11 // pred_check_branch
          %75 = sbr.rel (%p73) target = $region16
        $region15: #{tpu_custom_call.1} parent=11 // pred_region
          %s77 = ssub.s32 32, 32
          %78 = vsyncadd [#allocation3], %s77
          %s80 = sshll.u32 [#allocation2], 4
          %s81 = int_to_ptr.vmem [resolvable:$true] %s80
          %83 = dma.hbm_to_vmem [thread:$0]  %s0, 32, %s81, [#allocation3]
        $region16: #{tpu_custom_call.1} parent=11 // pred_fallthru
          _
      $region12: #{tpu_custom_call.1} parent=5 // pred_fallthru
        _
      %p84 = scmp.lt.s32.totalorder %s11, 2
      // Predicated region
      $region17: #{tpu_custom_call.1} parent=5 // pred_check
        %p85 = pneg %p84
      $region18: #{tpu_custom_call.1} parent=5 // pred_check_branch
        %87 = sbr.rel (%p85) target = $region20
      $region19: #{tpu_custom_call.1} parent=5 // pred_region
        _
      $region20: #{tpu_custom_call.1} parent=5 // pred_fallthru
        _
      %p88 = scmp.le.s32.totalorder 1, %s11
      %p89 = scmp.lt.s32.totalorder %s11, 3
      %p90 = pnand %p88, %p89
      %p91 = pneg %p90
      // Predicated region
      $region21: #{tpu_custom_call.1} parent=5 // pred_check
        _
      $region22: #{tpu_custom_call.1} parent=5 // pred_check_branch
        %93 = sbr.rel (%p90) target = $region24
      $region23: #{tpu_custom_call.1} parent=5 // pred_region
        %s94 = ssub.s32 %s11, 1
        // Predicated region
        $region25: #{tpu_custom_call.1} parent=23 // pred_check
          %p95 = pneg %p32
        $region26: #{tpu_custom_call.1} parent=23 // pred_check_branch
          %97 = sbr.rel (%p95) target = $region28
        $region27: #{tpu_custom_call.1} parent=23 // pred_region
          %98 = dma.done [#allocation3], 32
        $region28: #{tpu_custom_call.1} parent=23 // pred_fallthru
          _
        %p99 = pneg %p32
        %p100 = pneg %p29
        %p101 = pneg %p58
        %p102 = pneg %p55
        %s103 = sand.u32 %s45, 1
        %s104 = scalar_lea.sflag [#allocation4], %s103
        %s105 = sand.u32 %s45, 1
        %s106 = smul.addr %s105, 32
        %s107 = scalar_lea.vmem [#allocation5], %s106
        %s108 = smul.u32 4, %s16
        %s109 = smul.u32 %s16, 32
        %v110 = vld [vmem:[#allocation2] sm:$0x3]
        %v111 = vlaneseq
        %v112 = vshrl.u32 %v111, 7
        %v113 = vadd.s32 %v112, 8
        %v114 = vadd.s32 %v112, 16
        %v115 = vadd.s32 %v112, 24
        %v116 = vstv %s109
        %v117 = vadd.s32 %v116, %v112
        %v118 = vadd.s32 %v116, %v113
        %v119 = vadd.s32 %v116, %v114
        %v120 = vadd.s32 %v116, %v115
        %v121 = vcvt.s32.f32 %v117
        %v122 = vcvt.s32.f32 %v118
        %v123 = vcvt.s32.f32 %v119
        %v124 = vcvt.s32.f32 %v120
        %v125 = vlaneseq
        %v126 = vshrl.u32 %v125, 7
        %v127 = vsub.s32 0, %v126
        %v128 = vrot.slane %v110, %v127
        %v129 = vmul.f32 %v121, %v128
        %v130 = vmul.f32 %v122, %v128
        %v131 = vmul.f32 %v123, %v128
        %v132 = vmul.f32 %v124, %v128
        %v133 = vlaneseq
        %v134 = vshrl.u32 %v133, 7
        %v135 = vsub.s32 1, %v134
        %v136 = vrot.slane %v110, %v135
        %v137 = vadd.f32 %v129, %v136
        %v138 = vadd.f32 %v130, %v136
        %v139 = vadd.f32 %v131, %v136
        %v140 = vadd.f32 %v132, %v136
        %v141 = vand.u32 2147483647, %v137
        %vm142 = vcmp.le.f32.partialorder %v141, 0.7853982
        %vm143 = vcmp.lt.s32.totalorder %v137, 0
        %v144 = vand.u32 %v137, 2139095040
        %v145 = vshrl.u32 %v144, 23
        %v146 = vsub.s32 %v145, 127
        %v147 = vand.u32 2147483647, %v137
        %v148 = vand.u32 %v147, 8388607
        %v149 = vor.u32 %v148, 8388608
        %v150 = vsub.s32 0, %v149
        %v151 = vadd.s32 %v146, 1
        %vm152 = vcmp.gt.s32.totalorder %v151, 0
        %v153 = vsel %vm152, %v151, 0
        %v154 = vshrl.u32 %v153, 5
        %v155 = vand.u32 %v153, 31
        %v156 = vsub.s32 32, %v155
        %v157 = vshrl.u32 683565275, %v156
        %v158 = vshll.u32 683565275, %v155
        %v159 = vshrl.u32 2475754826, %v156
        %v160 = vor.u32 %v158, %v159
        %v161 = vshll.u32 2475754826, %v155
        %v162 = vshrl.u32 2131351028, %v156
        %v163 = vor.u32 %v161, %v162
        %v164 = vshll.u32 2131351028, %v155
        %v165 = vshrl.u32 2102212464, %v156
        %v166 = vor.u32 %v164, %v165
        %v167 = vshll.u32 2102212464, %v155
        %v168 = vshrl.u32 920167782, %v156
        %v169 = vor.u32 %v167, %v168
        %v170 = vshll.u32 920167782, %v155
        %v171 = vshrl.u32 1326507024, %v156
        %v172 = vor.u32 %v170, %v171
        %vm173 = vcmp.lt.s32.totalorder %v154, 1
        %vm174 = vcmp.lt.s32.totalorder %v154, 2
        %vm175 = vcmp.lt.s32.totalorder %v154, 3
        %vm176 = vcmp.lt.s32.totalorder %v154, 4
        %v177 = vsel %vm173, %v157, %v160
        %v178 = vsel %vm176, %v166, 2102212464
        %v179 = vsel %vm175, %v163, %v178
        %v180 = vsel %vm174, %v177, %v179
        %v181 = vsel %vm173, %v160, %v163
        %v182 = vsel %vm176, %v169, 920167782
        %v183 = vsel %vm175, %v166, %v182
        %v184 = vsel %vm174, %v181, %v183
        %v185 = vsel %vm173, %v163, %v166
        %v186 = vsel %vm176, %v172, 1326507024
        %v187 = vsel %vm175, %v169, %v186
        %v188 = vsel %vm174, %v185, %v187
        %v189 = vshll.u32 %v149, 8
        %v190 = vmul.u32.u64.compose %v189, %v188
        %v191 = vextract.low.u32 %v190
        %v192 = vextract.high.u32 %v190
        %v193 = vmul.u32.u64.compose %v189, %v184
        %v194 = vextract.low.u32 %v193
        %v195 = vextract.high.u32 %v193
        %v196 = vmul.u32 %v189, %v180
        %v197 = vadd.s32 %v192, %v194
        %vm198 = vc.u32 %v192, %v194
        %v199 = vadd.s32 %v195, 1
        %v200 = vsel %vm198, %v199, %v195
        %v201 = vadd.s32 %v196, %v200
        %v202 = vadd.s32 %v201, 536870912
        %v203 = vshrl.u32 %v202, 30
        %v204 = vshll.u32 %v203, 30
        %v205 = vsub.s32 %v201, %v204
        %vm206 = vcmp.lt.s32.totalorder %v205, 0
        %v207 = vsub.s32 0, %v205
        %v208 = vsel %vm206, %v207, %v205
        %v209 = vclz %v208
        %v210 = vsub.s32 %v209, 2
        %vm211 = vcmp.gt.s32.totalorder 0, %v210
        %v212 = vsel %vm211, 0, %v210
        %v213 = vsub.s32 32, %v212
        %v214 = vshll.u32 %v205, %v212
        %v215 = vshrl.u32 %v197, %v213
        %v216 = vor.u32 %v214, %v215
        %v217 = vsub.s32 4294967266, %v212
        %v218 = vadd.s32 %v217, 127
        %v219 = vshll.u32 %v218, 23
        %v220 = vor.u32 4788187, %v219
        %v221 = vand.u32 2147483647, %v220
        %v223 = vcvt.s32.f32 %v216
        %v224 = vmul.f32 %v223, %v221
        %v225 = vxor.u32 %v224, 2147483648
        %v226 = vsel %vm143, %v225, %v224
        %v227 = vsub.s32 4, %v203
        %v228 = vsel %vm143, %v227, %v203
        %v229 = vsel %vm142, %v137, %v226
        %v230 = vsel %vm142, 0, %v228
        %v231 = vcosq.f32.pop %v229
        %v232 = vsinq.f32.pop %v229
        %vm233 = vweird.f32 %v137
        %v234 = vadd.s32 %v230, 3
        %v235 = vand.u32 %v234, 3
        %vm236 = vcmp.lt.s32.totalorder %v235, 2
        %vm237 = vcmp.eq.s32.totalorder %v235, 0
        %v238 = vxor.u32 %v232, 2147483648
        %v239 = vsel %vm237, %v231, %v238
        %vm240 = vcmp.eq.s32.totalorder %v235, 2
        %v241 = vxor.u32 %v231, 2147483648
        %v242 = vsel %vm240, %v241, %v232
        %v243 = vsel %vm236, %v239, %v242
        %v244 = vsel %vm233, nan, %v243
        %v245 = vand.u32 2147483647, %v138
        %vm246 = vcmp.le.f32.partialorder %v245, 0.7853982
        %vm247 = vcmp.lt.s32.totalorder %v138, 0
        %v248 = vand.u32 %v138, 2139095040
        %v249 = vshrl.u32 %v248, 23
        %v250 = vsub.s32 %v249, 127
        %v251 = vand.u32 2147483647, %v138
        %v252 = vand.u32 %v251, 8388607
        %v253 = vor.u32 %v252, 8388608
        %v254 = vsub.s32 0, %v253
        %v255 = vadd.s32 %v250, 1
        %vm256 = vcmp.gt.s32.totalorder %v255, 0
        %v257 = vsel %vm256, %v255, 0
        %v258 = vshrl.u32 %v257, 5
        %v259 = vand.u32 %v257, 31
        %v260 = vsub.s32 32, %v259
        %v261 = vshrl.u32 683565275, %v260
        %v262 = vshll.u32 683565275, %v259
        %v263 = vshrl.u32 2475754826, %v260
        %v264 = vor.u32 %v262, %v263
        %v265 = vshll.u32 2475754826, %v259
        %v266 = vshrl.u32 2131351028, %v260
        %v267 = vor.u32 %v265, %v266
        %v268 = vshll.u32 2131351028, %v259
        %v269 = vshrl.u32 2102212464, %v260
        %v270 = vor.u32 %v268, %v269
        %v271 = vshll.u32 2102212464, %v259
        %v272 = vshrl.u32 920167782, %v260
        %v273 = vor.u32 %v271, %v272
        %v274 = vshll.u32 920167782, %v259
        %v275 = vshrl.u32 1326507024, %v260
        %v276 = vor.u32 %v274, %v275
        %vm277 = vcmp.lt.s32.totalorder %v258, 1
        %vm278 = vcmp.lt.s32.totalorder %v258, 2
        %vm279 = vcmp.lt.s32.totalorder %v258, 3
        %vm280 = vcmp.lt.s32.totalorder %v258, 4
        %v281 = vsel %vm277, %v261, %v264
        %v282 = vsel %vm280, %v270, 2102212464
        %v283 = vsel %vm279, %v267, %v282
        %v284 = vsel %vm278, %v281, %v283
        %v285 = vsel %vm277, %v264, %v267
        %v286 = vsel %vm280, %v273, 920167782
        %v287 = vsel %vm279, %v270, %v286
        %v288 = vsel %vm278, %v285, %v287
        %v289 = vsel %vm277, %v267, %v270
        %v290 = vsel %vm280, %v276, 1326507024
        %v291 = vsel %vm279, %v273, %v290
        %v292 = vsel %vm278, %v289, %v291
        %v293 = vshll.u32 %v253, 8
        %v294 = vmul.u32.u64.compose %v293, %v292
        %v295 = vextract.low.u32 %v294
        %v296 = vextract.high.u32 %v294
        %v297 = vmul.u32.u64.compose %v293, %v288
        %v298 = vextract.low.u32 %v297
        %v299 = vextract.high.u32 %v297
        %v300 = vmul.u32 %v293, %v284
        %v301 = vadd.s32 %v296, %v298
        %vm302 = vc.u32 %v296, %v298
        %v303 = vadd.s32 %v299, 1
        %v304 = vsel %vm302, %v303, %v299
        %v305 = vadd.s32 %v300, %v304
        %v306 = vadd.s32 %v305, 536870912
        %v307 = vshrl.u32 %v306, 30
        %v308 = vshll.u32 %v307, 30
        %v309 = vsub.s32 %v305, %v308
        %vm310 = vcmp.lt.s32.totalorder %v309, 0
        %v311 = vsub.s32 0, %v309
        %v312 = vsel %vm310, %v311, %v309
        %v313 = vclz %v312
        %v314 = vsub.s32 %v313, 2
        %vm315 = vcmp.gt.s32.totalorder 0, %v314
        %v316 = vsel %vm315, 0, %v314
        %v317 = vsub.s32 32, %v316
        %v318 = vshll.u32 %v309, %v316
        %v319 = vshrl.u32 %v301, %v317
        %v320 = vor.u32 %v318, %v319
        %v321 = vsub.s32 4294967266, %v316
        %v322 = vadd.s32 %v321, 127
        %v323 = vshll.u32 %v322, 23
        %v324 = vor.u32 4788187, %v323
        %v325 = vand.u32 2147483647, %v324
        %v327 = vcvt.s32.f32 %v320
        %v328 = vmul.f32 %v327, %v325
        %v329 = vxor.u32 %v328, 2147483648
        %v330 = vsel %vm247, %v329, %v328
        %v331 = vsub.s32 4, %v307
        %v332 = vsel %vm247, %v331, %v307
        %v333 = vsel %vm246, %v138, %v330
        %v334 = vsel %vm246, 0, %v332
        %v335 = vcosq.f32.pop %v333
        %v336 = vsinq.f32.pop %v333
        %vm337 = vweird.f32 %v138
        %v338 = vadd.s32 %v334, 3
        %v339 = vand.u32 %v338, 3
        %vm340 = vcmp.lt.s32.totalorder %v339, 2
        %vm341 = vcmp.eq.s32.totalorder %v339, 0
        %v342 = vxor.u32 %v336, 2147483648
        %v343 = vsel %vm341, %v335, %v342
        %vm344 = vcmp.eq.s32.totalorder %v339, 2
        %v345 = vxor.u32 %v335, 2147483648
        %v346 = vsel %vm344, %v345, %v336
        %v347 = vsel %vm340, %v343, %v346
        %v348 = vsel %vm337, nan, %v347
        %v349 = vand.u32 2147483647, %v139
        %vm350 = vcmp.le.f32.partialorder %v349, 0.7853982
        %vm351 = vcmp.lt.s32.totalorder %v139, 0
        %v352 = vand.u32 %v139, 2139095040
        %v353 = vshrl.u32 %v352, 23
        %v354 = vsub.s32 %v353, 127
        %v355 = vand.u32 2147483647, %v139
        %v356 = vand.u32 %v355, 8388607
        %v357 = vor.u32 %v356, 8388608
        %v358 = vsub.s32 0, %v357
        %v359 = vadd.s32 %v354, 1
        %vm360 = vcmp.gt.s32.totalorder %v359, 0
        %v361 = vsel %vm360, %v359, 0
        %v362 = vshrl.u32 %v361, 5
        %v363 = vand.u32 %v361, 31
        %v364 = vsub.s32 32, %v363
        %v365 = vshrl.u32 683565275, %v364
        %v366 = vshll.u32 683565275, %v363
        %v367 = vshrl.u32 2475754826, %v364
        %v368 = vor.u32 %v366, %v367
        %v369 = vshll.u32 2475754826, %v363
        %v370 = vshrl.u32 2131351028, %v364
        %v371 = vor.u32 %v369, %v370
        %v372 = vshll.u32 2131351028, %v363
        %v373 = vshrl.u32 2102212464, %v364
        %v374 = vor.u32 %v372, %v373
        %v375 = vshll.u32 2102212464, %v363
        %v376 = vshrl.u32 920167782, %v364
        %v377 = vor.u32 %v375, %v376
        %v378 = vshll.u32 920167782, %v363
        %v379 = vshrl.u32 1326507024, %v364
        %v380 = vor.u32 %v378, %v379
        %vm381 = vcmp.lt.s32.totalorder %v362, 1
        %vm382 = vcmp.lt.s32.totalorder %v362, 2
        %vm383 = vcmp.lt.s32.totalorder %v362, 3
        %vm384 = vcmp.lt.s32.totalorder %v362, 4
        %v385 = vsel %vm381, %v365, %v368
        %v386 = vsel %vm384, %v374, 2102212464
        %v387 = vsel %vm383, %v371, %v386
        %v388 = vsel %vm382, %v385, %v387
        %v389 = vsel %vm381, %v368, %v371
        %v390 = vsel %vm384, %v377, 920167782
        %v391 = vsel %vm383, %v374, %v390
        %v392 = vsel %vm382, %v389, %v391
        %v393 = vsel %vm381, %v371, %v374
        %v394 = vsel %vm384, %v380, 1326507024
        %v395 = vsel %vm383, %v377, %v394
        %v396 = vsel %vm382, %v393, %v395
        %v397 = vshll.u32 %v357, 8
        %v398 = vmul.u32.u64.compose %v397, %v396
        %v399 = vextract.low.u32 %v398
        %v400 = vextract.high.u32 %v398
        %v401 = vmul.u32.u64.compose %v397, %v392
        %v402 = vextract.low.u32 %v401
        %v403 = vextract.high.u32 %v401
        %v404 = vmul.u32 %v397, %v388
        %v405 = vadd.s32 %v400, %v402
        %vm406 = vc.u32 %v400, %v402
        %v407 = vadd.s32 %v403, 1
        %v408 = vsel %vm406, %v407, %v403
        %v409 = vadd.s32 %v404, %v408
        %v410 = vadd.s32 %v409, 536870912
        %v411 = vshrl.u32 %v410, 30
        %v412 = vshll.u32 %v411, 30
        %v413 = vsub.s32 %v409, %v412
        %vm414 = vcmp.lt.s32.totalorder %v413, 0
        %v415 = vsub.s32 0, %v413
        %v416 = vsel %vm414, %v415, %v413
        %v417 = vclz %v416
        %v418 = vsub.s32 %v417, 2
        %vm419 = vcmp.gt.s32.totalorder 0, %v418
        %v420 = vsel %vm419, 0, %v418
        %v421 = vsub.s32 32, %v420
        %v422 = vshll.u32 %v413, %v420
        %v423 = vshrl.u32 %v405, %v421
        %v424 = vor.u32 %v422, %v423
        %v425 = vsub.s32 4294967266, %v420
        %v426 = vadd.s32 %v425, 127
        %v427 = vshll.u32 %v426, 23
        %v428 = vor.u32 4788187, %v427
        %v429 = vand.u32 2147483647, %v428
        %v431 = vcvt.s32.f32 %v424
        %v432 = vmul.f32 %v431, %v429
        %v433 = vxor.u32 %v432, 2147483648
        %v434 = vsel %vm351, %v433, %v432
        %v435 = vsub.s32 4, %v411
        %v436 = vsel %vm351, %v435, %v411
        %v437 = vsel %vm350, %v139, %v434
        %v438 = vsel %vm350, 0, %v436
        %v439 = vcosq.f32.pop %v437
        %v440 = vsinq.f32.pop %v437
        %vm441 = vweird.f32 %v139
        %v442 = vadd.s32 %v438, 3
        %v443 = vand.u32 %v442, 3
        %vm444 = vcmp.lt.s32.totalorder %v443, 2
        %vm445 = vcmp.eq.s32.totalorder %v443, 0
        %v446 = vxor.u32 %v440, 2147483648
        %v447 = vsel %vm445, %v439, %v446
        %vm448 = vcmp.eq.s32.totalorder %v443, 2
        %v449 = vxor.u32 %v439, 2147483648
        %v450 = vsel %vm448, %v449, %v440
        %v451 = vsel %vm444, %v447, %v450
        %v452 = vsel %vm441, nan, %v451
        %v453 = vand.u32 2147483647, %v140
        %vm454 = vcmp.le.f32.partialorder %v453, 0.7853982
        %vm455 = vcmp.lt.s32.totalorder %v140, 0
        %v456 = vand.u32 %v140, 2139095040
        %v457 = vshrl.u32 %v456, 23
        %v458 = vsub.s32 %v457, 127
        %v459 = vand.u32 2147483647, %v140
        %v460 = vand.u32 %v459, 8388607
        %v461 = vor.u32 %v460, 8388608
        %v462 = vsub.s32 0, %v461
        %v463 = vadd.s32 %v458, 1
        %vm464 = vcmp.gt.s32.totalorder %v463, 0
        %v465 = vsel %vm464, %v463, 0
        %v466 = vshrl.u32 %v465, 5
        %v467 = vand.u32 %v465, 31
        %v468 = vsub.s32 32, %v467
        %v469 = vshrl.u32 683565275, %v468
        %v470 = vshll.u32 683565275, %v467
        %v471 = vshrl.u32 2475754826, %v468
        %v472 = vor.u32 %v470, %v471
        %v473 = vshll.u32 2475754826, %v467
        %v474 = vshrl.u32 2131351028, %v468
        %v475 = vor.u32 %v473, %v474
        %v476 = vshll.u32 2131351028, %v467
        %v477 = vshrl.u32 2102212464, %v468
        %v478 = vor.u32 %v476, %v477
        %v479 = vshll.u32 2102212464, %v467
        %v480 = vshrl.u32 920167782, %v468
        %v481 = vor.u32 %v479, %v480
        %v482 = vshll.u32 920167782, %v467
        %v483 = vshrl.u32 1326507024, %v468
        %v484 = vor.u32 %v482, %v483
        %vm485 = vcmp.lt.s32.totalorder %v466, 1
        %vm486 = vcmp.lt.s32.totalorder %v466, 2
        %vm487 = vcmp.lt.s32.totalorder %v466, 3
        %vm488 = vcmp.lt.s32.totalorder %v466, 4
        %v489 = vsel %vm485, %v469, %v472
        %v490 = vsel %vm488, %v478, 2102212464
        %v491 = vsel %vm487, %v475, %v490
        %v492 = vsel %vm486, %v489, %v491
        %v493 = vsel %vm485, %v472, %v475
        %v494 = vsel %vm488, %v481, 920167782
        %v495 = vsel %vm487, %v478, %v494
        %v496 = vsel %vm486, %v493, %v495
        %v497 = vsel %vm485, %v475, %v478
        %v498 = vsel %vm488, %v484, 1326507024
        %v499 = vsel %vm487, %v481, %v498
        %v500 = vsel %vm486, %v497, %v499
        %v501 = vshll.u32 %v461, 8
        %v502 = vmul.u32.u64.compose %v501, %v500
        %v503 = vextract.low.u32 %v502
        %v504 = vextract.high.u32 %v502
        %v505 = vmul.u32.u64.compose %v501, %v496
        %v506 = vextract.low.u32 %v505
        %v507 = vextract.high.u32 %v505
        %v508 = vmul.u32 %v501, %v492
        %v509 = vadd.s32 %v504, %v506
        %vm510 = vc.u32 %v504, %v506
        %v511 = vadd.s32 %v507, 1
        %v512 = vsel %vm510, %v511, %v507
        %v513 = vadd.s32 %v508, %v512
        %v514 = vadd.s32 %v513, 536870912
        %v515 = vshrl.u32 %v514, 30
        %v516 = vshll.u32 %v515, 30
        %v517 = vsub.s32 %v513, %v516
        %vm518 = vcmp.lt.s32.totalorder %v517, 0
        %v519 = vsub.s32 0, %v517
        %v520 = vsel %vm518, %v519, %v517
        %v521 = vclz %v520
        %v522 = vsub.s32 %v521, 2
        %vm523 = vcmp.gt.s32.totalorder 0, %v522
        %v524 = vsel %vm523, 0, %v522
        %v525 = vsub.s32 32, %v524
        %v526 = vshll.u32 %v517, %v524
        %v527 = vshrl.u32 %v509, %v525
        %v528 = vor.u32 %v526, %v527
        %v529 = vsub.s32 4294967266, %v524
        %v530 = vadd.s32 %v529, 127
        %v531 = vshll.u32 %v530, 23
        %v532 = vor.u32 4788187, %v531
        %v533 = vand.u32 2147483647, %v532
        %v535 = vcvt.s32.f32 %v528
        %v536 = vmul.f32 %v535, %v533
        %v537 = vxor.u32 %v536, 2147483648
        %v538 = vsel %vm455, %v537, %v536
        %v539 = vsub.s32 4, %v515
        %v540 = vsel %vm455, %v539, %v515
        %v541 = vsel %vm454, %v140, %v538
        %v542 = vsel %vm454, 0, %v540
        %v543 = vcosq.f32.pop %v541
        %v544 = vsinq.f32.pop %v541
        %vm545 = vweird.f32 %v140
        %v546 = vadd.s32 %v542, 3
        %v547 = vand.u32 %v546, 3
        %vm548 = vcmp.lt.s32.totalorder %v547, 2
        %vm549 = vcmp.eq.s32.totalorder %v547, 0
        %v550 = vxor.u32 %v544, 2147483648
        %v551 = vsel %vm549, %v543, %v550
        %vm552 = vcmp.eq.s32.totalorder %v547, 2
        %v553 = vxor.u32 %v543, 2147483648
        %v554 = vsel %vm552, %v553, %v544
        %v555 = vsel %vm548, %v551, %v554
        %v556 = vsel %vm545, nan, %v555
        %557 = vst [vmem:[%s107] sm:$0xff] %v244
        %558 = vst [vmem:[%s107 + $0x8] sm:$0xff] %v348
        %559 = vst [vmem:[%s107 + $0x10] sm:$0xff] %v452
        %560 = vst [vmem:[%s107 + $0x18] sm:$0xff] %v556
        %s561 = sand.u32 %s45, 1
        %s562 = scalar_lea.sflag [#allocation4], %s561
        %s563 = sand.u32 %s45, 1
        %s564 = smul.addr %s563, 32
        %s565 = scalar_lea.vmem [#allocation5], %s564
        // Predicated region
        $region29: #{tpu_custom_call.1} parent=23 // pred_check
          %p566 = pneg %p55
        $region30: #{tpu_custom_call.1} parent=23 // pred_check_branch
          %568 = sbr.rel (%p566) target = $region32
        $region31: #{tpu_custom_call.1} parent=23 // pred_region
          %s569 = smul.u32 4, %s16
          %s571 = ssub.s32 512, 512
          %572 = vsyncadd %s562, %s571
          %s573 = smul.addr %s569, 128
          %s574 = scalar_lea.hbm %s1, %s573
          %s575 = sshll.u32 %s565, 4
          %s576 = int_to_ptr.vmem [resolvable:$true] %s575
          %581 = dma.vmem_to_hbm [thread:$0]  %s576, 512, %s574, %s562, 128, 128, 8
        $region32: #{tpu_custom_call.1} parent=23 // pred_fallthru
          _
      $region24: #{tpu_custom_call.1} parent=5 // pred_fallthru
        _
      %p582 = scmp.le.s32.totalorder 2, %s11
      // Predicated region
      $region33: #{tpu_custom_call.1} parent=5 // pred_check
        %p583 = pneg %p582
      $region34: #{tpu_custom_call.1} parent=5 // pred_check_branch
        %585 = sbr.rel (%p583) target = $region36
      $region35: #{tpu_custom_call.1} parent=5 // pred_region
        %s586 = ssub.s32 %s11, 2
        // Predicated region
        $region37: #{tpu_custom_call.1} parent=35 // pred_check
          %p587 = pneg %p61
        $region38: #{tpu_custom_call.1} parent=35 // pred_check_branch
          %589 = sbr.rel (%p587) target = $region40
        $region39: #{tpu_custom_call.1} parent=35 // pred_region
          %s590 = sand.u32 %s46, 1
          %s591 = scalar_lea.sflag [#allocation4], %s590
          %s592 = sand.u32 %s46, 1
          %s593 = smul.addr %s592, 32
          %s594 = scalar_lea.vmem [#allocation5], %s593
          %595 = dma.done %s591, 512
        $region40: #{tpu_custom_call.1} parent=35 // pred_fallthru
          _
      $region36: #{tpu_custom_call.1} parent=5 // pred_fallthru
        _
    $region6: #{tpu_custom_call.1} parent=1 // loop_footer
      %s15 = sadd.s32 1, %s11
    $region7: #{tpu_custom_call.1} parent=1 // loop_footer_branch
      %10 = sbr.rel target = $region3
    $region8: #{tpu_custom_call.1} parent=1 // loop_exit
      _
    %596 = vsyncpa [#allocation3], 1
    %s597 = scalar_lea.sflag [#allocation3], 1
    %598 = vsyncpa %s597, 1
    %599 = vsyncpa [#allocation4], 1
    %s600 = scalar_lea.sflag [#allocation4], 1
    %601 = vsyncpa %s600, 1

</llo_original>
